<compile_context>
chip_gen: v7x
topology: tpu7x:2x2x1
jax: 0.10.0
libtpu: 0.0.40
codegen_flags: <defaults>
</compile_context>

<pallas_src>
import jax
import jax.numpy as jnp
from jax import lax
from jax.experimental import pallas as pl
from jax.experimental.pallas import tpu as pltpu


def _round_up(x, m):
    return ((x + m - 1) // m) * m


def _pick_time_tile(T, TB, H, budget_bytes=8 << 20):
    """Largest divisor of T whose double-buffered (tt, TB, 4H) f32 tile fits."""
    per_t = TB * 4 * H * 4 * 2  # bytes per timestep, double-buffered
    tt = max(1, min(T, budget_bytes // max(per_t, 1)))
    while T % tt:
        tt -= 1
    return tt


def _lstm_kernel(xp_ref, whh_ref, wlin_ref, blin_ref, out_ref, h_scr, c_scr):
    # xp_ref : (TT, TB, 4H)  precomputed x @ W_ih^T + b_ih + b_hh (lane-dense)
    # whh_ref: (H, 4H)       wlin_ref: (1, H)     blin_ref: (1, 1)
    # out_ref: (1, TB)       h_scr/c_scr: (TB, H) f32, persist across the T grid
    t_idx = pl.program_id(1)
    TT = xp_ref.shape[0]
    H = whh_ref.shape[0]

    @pl.when(t_idx == 0)
    def _init():
        h_scr[...] = jnp.zeros_like(h_scr)
        c_scr[...] = jnp.zeros_like(c_scr)

    whh = whh_ref[...]

    def step(t, carry):
        h, c = carry
        # Single per-step matmul on the serial path; input term precomputed.
        gates = xp_ref[t] + jnp.dot(h, whh, preferred_element_type=jnp.float32)
        i_g = jax.nn.sigmoid(gates[:, 0 * H:1 * H])
        f_g = jax.nn.sigmoid(gates[:, 1 * H:2 * H])
        g_g = jnp.tanh(gates[:, 2 * H:3 * H])
        o_g = jax.nn.sigmoid(gates[:, 3 * H:4 * H])
        c_new = f_g * c + i_g * g_g
        h_new = o_g * jnp.tanh(c_new)
        return (h_new, c_new)

    unroll = True if TT <= 16 else 8
    h, c = lax.fori_loop(0, TT, step, (h_scr[...], c_scr[...]), unroll=unroll)
    h_scr[...] = h
    c_scr[...] = c

    @pl.when(t_idx == pl.num_programs(1) - 1)
    def _head():
        # Lane-dense linear head: (1, H) @ (H, TB) -> (1, TB), batch on lanes.
        out_ref[...] = (
            jnp.dot(wlin_ref[...], h.T, preferred_element_type=jnp.float32)
            + blin_ref[...]
        )


def shallow_regression_lstm(x, params):
    """x: (batch, seq, num_sensors) float32. Returns (batch,) float32."""
    w_ih, w_hh, b_ih, b_hh, w_lin, b_lin = params
    B, T, F = x.shape
    H = w_hh.shape[1]  # PyTorch layout: w_hh is (4H, H)
    G = 4 * H
    assert w_ih.shape == (G, F) and w_hh.shape == (G, H)

    # ---- batch padding / tiling (sublane granule 8; lane-sized tiles if big) ----
    if B <= 512:
        TB = _round_up(max(B, 8), 8)
        B_pad = TB
    else:
        TB = 512                      # multiple of 128 -> lane-dense out blocks
        B_pad = _round_up(B, TB)
    nb = B_pad // TB

    # ---- time streaming tile ----
    TT = _pick_time_tile(T, TB, H)
    nt = T // TT

    # ---- hoisted input projection: ONE large matmul, bias folded in ----
    xf = x.astype(jnp.float32)
    xp = jnp.einsum("btf,gf->tbg", xf, w_ih.astype(jnp.float32))
    xp = xp + (b_ih + b_hh).astype(jnp.float32)          # (T, B, 4H)
    if B_pad != B:
        xp = jnp.pad(xp, ((0, 0), (0, B_pad - B), (0, 0)))

    whh_t = jnp.transpose(w_hh).astype(jnp.float32)       # (H, 4H)
    wlin_row = w_lin.reshape(1, H).astype(jnp.float32)    # (1, H)
    blin = b_lin.reshape(1, 1).astype(jnp.float32)        # (1, 1)

    cost = pl.CostEstimate(
        flops=int(2 * T * B_pad * H * G + 12 * T * B_pad * H + 2 * B_pad * H),
        transcendentals=int(5 * T * B_pad * H),
        bytes_accessed=int(xp.size * 4 + whh_t.size * 4 + wlin_row.size * 4
                           + B_pad * 4),
    )

    # Explicit VMEM budget (safe on v7x's 64 MiB physical / 32 MiB scoped default).
    vmem_budget = (2 * TT * TB * G * 4                    # double-buffered xp tile
                   + (whh_t.size + wlin_row.size + 1) * 4
                   + 2 * TB * H * 4                       # h/c scratch
                   + 2 * TB * 4                           # out buffers
                   + (2 << 20))                           # headroom
    vmem_budget = int(min(max(vmem_budget, 4 << 20), 32 << 20))

    out = pl.pallas_call(
        _lstm_kernel,
        out_shape=jax.ShapeDtypeStruct((1, B_pad), jnp.float32),
        grid_spec=pltpu.PrefetchScalarGridSpec(
            num_scalar_prefetch=0,
            grid=(nb, nt),
            in_specs=[
                pl.BlockSpec((TT, TB, G), lambda b, t: (t, b, 0)),  # streamed xp
                pl.BlockSpec((H, G), lambda b, t: (0, 0)),          # resident W_hh^T
                pl.BlockSpec((1, H), lambda b, t: (0, 0)),          # resident W_lin
                pl.BlockSpec((1, 1), lambda b, t: (0, 0)),          # resident b_lin
            ],
            out_specs=pl.BlockSpec((1, TB), lambda b, t: (0, b)),   # lane-dense out
            scratch_shapes=[
                pltpu.VMEM((TB, H), jnp.float32),  # h carry
                pltpu.VMEM((TB, H), jnp.float32),  # c carry
            ],
        ),
        compiler_params=pltpu.CompilerParams(
            dimension_semantics=("parallel", "arbitrary"),
            vmem_limit_bytes=vmem_budget,
        ),
        cost_estimate=cost,
    )(xp, whh_t, wlin_row, blin)

    return out[0, :B]  # flatten() -> (batch,)


def init_params(key, num_sensors, hidden_units):
    """Deterministic init mimicking PyTorch's U(-1/sqrt(H), 1/sqrt(H))."""
    H, F = hidden_units, num_sensors
    k = 1.0 / jnp.sqrt(jnp.float32(H))
    keys = jax.random.split(key, 6)
    w_ih = jax.random.uniform(keys[0], (4 * H, F), jnp.float32, -k, k)
    w_hh = jax.random.uniform(keys[1], (4 * H, H), jnp.float32, -k, k)
    b_ih = jax.random.uniform(keys[2], (4 * H,), jnp.float32, -k, k)
    b_hh = jax.random.uniform(keys[3], (4 * H,), jnp.float32, -k, k)
    w_lin = jax.random.uniform(keys[4], (1, H), jnp.float32, -k, k)
    b_lin = jax.random.uniform(keys[5], (1,), jnp.float32, -k, k)
    return (w_ih, w_hh, b_ih, b_hh, w_lin, b_lin)


def _reference_jax(x, params):
    """Pure-JAX reference for sanity checking (matches PyTorch semantics)."""
    w_ih, w_hh, b_ih, b_hh, w_lin, b_lin = params
    B, T, F = x.shape
    H = w_hh.shape[1]
    h = jnp.zeros((B, H), jnp.float32)
    c = jnp.zeros((B, H), jnp.float32)
    for t in range(T):
        gates = x[:, t, :] @ w_ih.T + b_ih + h @ w_hh.T + b_hh
        i = jax.nn.sigmoid(gates[:, 0:H])
        f = jax.nn.sigmoid(gates[:, H:2 * H])
        g = jnp.tanh(gates[:, 2 * H:3 * H])
        o = jax.nn.sigmoid(gates[:, 3 * H:4 * H])
        c = f * c + i * g
        h = o * jnp.tanh(c)
    return (h @ w_lin.T + b_lin).reshape(-1)


if __name__ == "__main__":
    batch, seq, num_sensors, hidden_units = 2, 8, 4, 32

    key = jax.random.PRNGKey(0)
    k_x, k_p = jax.random.split(key)
    x = jax.random.normal(k_x, (batch, seq, num_sensors), jnp.float32)
    params = init_params(k_p, num_sensors, hidden_units)

    out = shallow_regression_lstm(x, params)
    out = jax.block_until_ready(out)

    ref = _reference_jax(x, params)
    assert out.shape == (batch,)
    assert jnp.allclose(out, ref, atol=1e-4, rtol=1e-4)

    print("KERNEL_OK")
</pallas_src>

<mosaic_0001>
module attributes {stable_mosaic.version = 11 : i64} {
  func.func @_lstm_kernel(%arg0: i32, %arg1: i32, %arg2: memref<8x8x128xf32, #tpu.memory_space<vmem>>, %arg3: memref<32x128xf32, #tpu.memory_space<vmem>>, %arg4: memref<1x32xf32, #tpu.memory_space<vmem>>, %arg5: memref<1x1xf32, #tpu.memory_space<vmem>>, %arg6: memref<1x8xf32, #tpu.memory_space<vmem>>, %arg7: memref<8x32xf32, #tpu.memory_space<vmem>>, %arg8: memref<8x32xf32, #tpu.memory_space<vmem>>) attributes {dimension_semantics = [#tpu.dimension_semantics<parallel>, #tpu.dimension_semantics<arbitrary>], iteration_bounds = array<i64: 1, 1>, scalar_prefetch = 0 : i64, scratch_operands = 2 : i64, tpu.core_type = #tpu.core_type<tc>, window_params = [{transform_indices = @transform_0, window_bounds = array<i64: 8, 8, 128>}, {pipeline_mode = #tpu.pipeline_mode<synchronous>, transform_indices = @transform_1, window_bounds = array<i64: 32, 128>}, {pipeline_mode = #tpu.pipeline_mode<synchronous>, transform_indices = @transform_2, window_bounds = array<i64: 1, 32>}, {pipeline_mode = #tpu.pipeline_mode<synchronous>, transform_indices = @transform_3, window_bounds = array<i64: 1, 1>}, {transform_indices = @transform_4, window_bounds = array<i64: 1, 8>}]} {
    %c0_i32 = arith.constant 0 : i32
    %0 = arith.cmpi eq, %arg1, %c0_i32 : i32
    %1 = arith.extui %0 : i1 to i32
    %c0_i32_0 = arith.constant 0 : i32
    %2 = arith.cmpi ne, %1, %c0_i32_0 : i32
    scf.if %2 {
      %cst_60 = arith.constant 0.000000e+00 : f32
      %251 = vector.broadcast %cst_60 : f32 to vector<8x32xf32>
      %c0_61 = arith.constant 0 : index
      %c0_62 = arith.constant 0 : index
      %252 = vector.load %arg7[%c0_61, %c0_62] : memref<8x32xf32, #tpu.memory_space<vmem>>, vector<8x32xf32>
      tpu.vector_store %arg7[%c0_61, %c0_62], %251 {strides = array<i32>} : memref<8x32xf32, #tpu.memory_space<vmem>>, vector<8x32xf32>,
      %cst_63 = arith.constant 0.000000e+00 : f32
      %253 = vector.broadcast %cst_63 : f32 to vector<8x32xf32>
      %c0_64 = arith.constant 0 : index
      %c0_65 = arith.constant 0 : index
      %254 = vector.load %arg8[%c0_64, %c0_65] : memref<8x32xf32, #tpu.memory_space<vmem>>, vector<8x32xf32>
      tpu.vector_store %arg8[%c0_64, %c0_65], %253 {strides = array<i32>} : memref<8x32xf32, #tpu.memory_space<vmem>>, vector<8x32xf32>,
    } else {
    }
    %c0 = arith.constant 0 : index
    %c0_1 = arith.constant 0 : index
    %3 = vector.load %arg3[%c0, %c0_1] : memref<32x128xf32, #tpu.memory_space<vmem>>, vector<32x128xf32>
    %c0_2 = arith.constant 0 : index
    %c0_3 = arith.constant 0 : index
    %4 = vector.load %arg7[%c0_2, %c0_3] : memref<8x32xf32, #tpu.memory_space<vmem>>, vector<8x32xf32>
    %c0_4 = arith.constant 0 : index
    %c0_5 = arith.constant 0 : index
    %5 = vector.load %arg8[%c0_4, %c0_5] : memref<8x32xf32, #tpu.memory_space<vmem>>, vector<8x32xf32>
    %c0_i32_6 = arith.constant 0 : i32
    %6 = arith.index_cast %c0_i32_6 : i32 to index
    %c0_7 = arith.constant 0 : index
    %c0_8 = arith.constant 0 : index
    %7 = vector.load %arg2[%6, %c0_7, %c0_8] : memref<8x8x128xf32, #tpu.memory_space<vmem>>, vector<1x8x128xf32>
    %8 = vector.shape_cast %7 : vector<1x8x128xf32> to vector<8x128xf32>
    %cst = arith.constant dense<0.000000e+00> : vector<8x128xf32>
    %9 = tpu.matmul %4, %3, %cst {dimension_numbers = #tpu.dot_dimension_numbers<[1], [0], [0], [1], [0, 0, 1, 1], [], []>} : vector<8x32xf32>, vector<32x128xf32>, vector<8x128xf32> -> vector<8x128xf32>
    %10 = arith.addf %8, %9 : vector<8x128xf32>
    %11 = vector.extract_strided_slice %10 {offsets = [0, 0], sizes = [8, 32], strides = [1, 1]} : vector<8x128xf32> to vector<8x32xf32>
    %12 = arith.negf %11 : vector<8x32xf32>
    %13 = math.exp %12 : vector<8x32xf32>
    %cst_9 = arith.constant 1.000000e+00 : f32
    %14 = vector.broadcast %cst_9 : f32 to vector<8x32xf32>
    %15 = arith.addf %14, %13 : vector<8x32xf32>
    %16 = arith.divf %14, %15 : vector<8x32xf32>
    %17 = vector.extract_strided_slice %10 {offsets = [0, 32], sizes = [8, 32], strides = [1, 1]} : vector<8x128xf32> to vector<8x32xf32>
    %18 = arith.negf %17 : vector<8x32xf32>
    %19 = math.exp %18 : vector<8x32xf32>
    %cst_10 = arith.constant 1.000000e+00 : f32
    %20 = vector.broadcast %cst_10 : f32 to vector<8x32xf32>
    %21 = arith.addf %20, %19 : vector<8x32xf32>
    %22 = arith.divf %20, %21 : vector<8x32xf32>
    %23 = vector.extract_strided_slice %10 {offsets = [0, 64], sizes = [8, 32], strides = [1, 1]} : vector<8x128xf32> to vector<8x32xf32>
    %24 = math.tanh %23 : vector<8x32xf32>
    %25 = vector.extract_strided_slice %10 {offsets = [0, 96], sizes = [8, 32], strides = [1, 1]} : vector<8x128xf32> to vector<8x32xf32>
    %26 = arith.negf %25 : vector<8x32xf32>
    %27 = math.exp %26 : vector<8x32xf32>
    %cst_11 = arith.constant 1.000000e+00 : f32
    %28 = vector.broadcast %cst_11 : f32 to vector<8x32xf32>
    %29 = arith.addf %28, %27 : vector<8x32xf32>
    %30 = arith.divf %28, %29 : vector<8x32xf32>
    %31 = arith.mulf %22, %5 : vector<8x32xf32>
    %32 = arith.mulf %16, %24 : vector<8x32xf32>
    %33 = arith.addf %31, %32 : vector<8x32xf32>
    %34 = math.tanh %33 : vector<8x32xf32>
    %35 = arith.mulf %30, %34 : vector<8x32xf32>
    %c1_i32 = arith.constant 1 : i32
    %36 = arith.index_cast %c1_i32 : i32 to index
    %c0_12 = arith.constant 0 : index
    %c0_13 = arith.constant 0 : index
    %37 = vector.load %arg2[%36, %c0_12, %c0_13] : memref<8x8x128xf32, #tpu.memory_space<vmem>>, vector<1x8x128xf32>
    %38 = vector.shape_cast %37 : vector<1x8x128xf32> to vector<8x128xf32>
    %cst_14 = arith.constant dense<0.000000e+00> : vector<8x128xf32>
    %39 = tpu.matmul %35, %3, %cst_14 {dimension_numbers = #tpu.dot_dimension_numbers<[1], [0], [0], [1], [0, 0, 1, 1], [], []>} : vector<8x32xf32>, vector<32x128xf32>, vector<8x128xf32> -> vector<8x128xf32>
    %40 = arith.addf %38, %39 : vector<8x128xf32>
    %41 = vector.extract_strided_slice %40 {offsets = [0, 0], sizes = [8, 32], strides = [1, 1]} : vector<8x128xf32> to vector<8x32xf32>
    %42 = arith.negf %41 : vector<8x32xf32>
    %43 = math.exp %42 : vector<8x32xf32>
    %cst_15 = arith.constant 1.000000e+00 : f32
    %44 = vector.broadcast %cst_15 : f32 to vector<8x32xf32>
    %45 = arith.addf %44, %43 : vector<8x32xf32>
    %46 = arith.divf %44, %45 : vector<8x32xf32>
    %47 = vector.extract_strided_slice %40 {offsets = [0, 32], sizes = [8, 32], strides = [1, 1]} : vector<8x128xf32> to vector<8x32xf32>
    %48 = arith.negf %47 : vector<8x32xf32>
    %49 = math.exp %48 : vector<8x32xf32>
    %cst_16 = arith.constant 1.000000e+00 : f32
    %50 = vector.broadcast %cst_16 : f32 to vector<8x32xf32>
    %51 = arith.addf %50, %49 : vector<8x32xf32>
    %52 = arith.divf %50, %51 : vector<8x32xf32>
    %53 = vector.extract_strided_slice %40 {offsets = [0, 64], sizes = [8, 32], strides = [1, 1]} : vector<8x128xf32> to vector<8x32xf32>
    %54 = math.tanh %53 : vector<8x32xf32>
    %55 = vector.extract_strided_slice %40 {offsets = [0, 96], sizes = [8, 32], strides = [1, 1]} : vector<8x128xf32> to vector<8x32xf32>
    %56 = arith.negf %55 : vector<8x32xf32>
    %57 = math.exp %56 : vector<8x32xf32>
    %cst_17 = arith.constant 1.000000e+00 : f32
    %58 = vector.broadcast %cst_17 : f32 to vector<8x32xf32>
    %59 = arith.addf %58, %57 : vector<8x32xf32>
    %60 = arith.divf %58, %59 : vector<8x32xf32>
    %61 = arith.mulf %52, %33 : vector<8x32xf32>
    %62 = arith.mulf %46, %54 : vector<8x32xf32>
    %63 = arith.addf %61, %62 : vector<8x32xf32>
    %64 = math.tanh %63 : vector<8x32xf32>
    %65 = arith.mulf %60, %64 : vector<8x32xf32>
    %c2_i32 = arith.constant 2 : i32
    %66 = arith.index_cast %c2_i32 : i32 to index
    %c0_18 = arith.constant 0 : index
    %c0_19 = arith.constant 0 : index
    %67 = vector.load %arg2[%66, %c0_18, %c0_19] : memref<8x8x128xf32, #tpu.memory_space<vmem>>, vector<1x8x128xf32>
    %68 = vector.shape_cast %67 : vector<1x8x128xf32> to vector<8x128xf32>
    %cst_20 = arith.constant dense<0.000000e+00> : vector<8x128xf32>
    %69 = tpu.matmul %65, %3, %cst_20 {dimension_numbers = #tpu.dot_dimension_numbers<[1], [0], [0], [1], [0, 0, 1, 1], [], []>} : vector<8x32xf32>, vector<32x128xf32>, vector<8x128xf32> -> vector<8x128xf32>
    %70 = arith.addf %68, %69 : vector<8x128xf32>
    %71 = vector.extract_strided_slice %70 {offsets = [0, 0], sizes = [8, 32], strides = [1, 1]} : vector<8x128xf32> to vector<8x32xf32>
    %72 = arith.negf %71 : vector<8x32xf32>
    %73 = math.exp %72 : vector<8x32xf32>
    %cst_21 = arith.constant 1.000000e+00 : f32
    %74 = vector.broadcast %cst_21 : f32 to vector<8x32xf32>
    %75 = arith.addf %74, %73 : vector<8x32xf32>
    %76 = arith.divf %74, %75 : vector<8x32xf32>
    %77 = vector.extract_strided_slice %70 {offsets = [0, 32], sizes = [8, 32], strides = [1, 1]} : vector<8x128xf32> to vector<8x32xf32>
    %78 = arith.negf %77 : vector<8x32xf32>
    %79 = math.exp %78 : vector<8x32xf32>
    %cst_22 = arith.constant 1.000000e+00 : f32
    %80 = vector.broadcast %cst_22 : f32 to vector<8x32xf32>
    %81 = arith.addf %80, %79 : vector<8x32xf32>
    %82 = arith.divf %80, %81 : vector<8x32xf32>
    %83 = vector.extract_strided_slice %70 {offsets = [0, 64], sizes = [8, 32], strides = [1, 1]} : vector<8x128xf32> to vector<8x32xf32>
    %84 = math.tanh %83 : vector<8x32xf32>
    %85 = vector.extract_strided_slice %70 {offsets = [0, 96], sizes = [8, 32], strides = [1, 1]} : vector<8x128xf32> to vector<8x32xf32>
    %86 = arith.negf %85 : vector<8x32xf32>
    %87 = math.exp %86 : vector<8x32xf32>
    %cst_23 = arith.constant 1.000000e+00 : f32
    %88 = vector.broadcast %cst_23 : f32 to vector<8x32xf32>
    %89 = arith.addf %88, %87 : vector<8x32xf32>
    %90 = arith.divf %88, %89 : vector<8x32xf32>
    %91 = arith.mulf %82, %63 : vector<8x32xf32>
    %92 = arith.mulf %76, %84 : vector<8x32xf32>
    %93 = arith.addf %91, %92 : vector<8x32xf32>
    %94 = math.tanh %93 : vector<8x32xf32>
    %95 = arith.mulf %90, %94 : vector<8x32xf32>
    %c3_i32 = arith.constant 3 : i32
    %96 = arith.index_cast %c3_i32 : i32 to index
    %c0_24 = arith.constant 0 : index
    %c0_25 = arith.constant 0 : index
    %97 = vector.load %arg2[%96, %c0_24, %c0_25] : memref<8x8x128xf32, #tpu.memory_space<vmem>>, vector<1x8x128xf32>
    %98 = vector.shape_cast %97 : vector<1x8x128xf32> to vector<8x128xf32>
    %cst_26 = arith.constant dense<0.000000e+00> : vector<8x128xf32>
    %99 = tpu.matmul %95, %3, %cst_26 {dimension_numbers = #tpu.dot_dimension_numbers<[1], [0], [0], [1], [0, 0, 1, 1], [], []>} : vector<8x32xf32>, vector<32x128xf32>, vector<8x128xf32> -> vector<8x128xf32>
    %100 = arith.addf %98, %99 : vector<8x128xf32>
    %101 = vector.extract_strided_slice %100 {offsets = [0, 0], sizes = [8, 32], strides = [1, 1]} : vector<8x128xf32> to vector<8x32xf32>
    %102 = arith.negf %101 : vector<8x32xf32>
    %103 = math.exp %102 : vector<8x32xf32>
    %cst_27 = arith.constant 1.000000e+00 : f32
    %104 = vector.broadcast %cst_27 : f32 to vector<8x32xf32>
    %105 = arith.addf %104, %103 : vector<8x32xf32>
    %106 = arith.divf %104, %105 : vector<8x32xf32>
    %107 = vector.extract_strided_slice %100 {offsets = [0, 32], sizes = [8, 32], strides = [1, 1]} : vector<8x128xf32> to vector<8x32xf32>
    %108 = arith.negf %107 : vector<8x32xf32>
    %109 = math.exp %108 : vector<8x32xf32>
    %cst_28 = arith.constant 1.000000e+00 : f32
    %110 = vector.broadcast %cst_28 : f32 to vector<8x32xf32>
    %111 = arith.addf %110, %109 : vector<8x32xf32>
    %112 = arith.divf %110, %111 : vector<8x32xf32>
    %113 = vector.extract_strided_slice %100 {offsets = [0, 64], sizes = [8, 32], strides = [1, 1]} : vector<8x128xf32> to vector<8x32xf32>
    %114 = math.tanh %113 : vector<8x32xf32>
    %115 = vector.extract_strided_slice %100 {offsets = [0, 96], sizes = [8, 32], strides = [1, 1]} : vector<8x128xf32> to vector<8x32xf32>
    %116 = arith.negf %115 : vector<8x32xf32>
    %117 = math.exp %116 : vector<8x32xf32>
    %cst_29 = arith.constant 1.000000e+00 : f32
    %118 = vector.broadcast %cst_29 : f32 to vector<8x32xf32>
    %119 = arith.addf %118, %117 : vector<8x32xf32>
    %120 = arith.divf %118, %119 : vector<8x32xf32>
    %121 = arith.mulf %112, %93 : vector<8x32xf32>
    %122 = arith.mulf %106, %114 : vector<8x32xf32>
    %123 = arith.addf %121, %122 : vector<8x32xf32>
    %124 = math.tanh %123 : vector<8x32xf32>
    %125 = arith.mulf %120, %124 : vector<8x32xf32>
    %c4_i32 = arith.constant 4 : i32
    %126 = arith.index_cast %c4_i32 : i32 to index
    %c0_30 = arith.constant 0 : index
    %c0_31 = arith.constant 0 : index
    %127 = vector.load %arg2[%126, %c0_30, %c0_31] : memref<8x8x128xf32, #tpu.memory_space<vmem>>, vector<1x8x128xf32>
    %128 = vector.shape_cast %127 : vector<1x8x128xf32> to vector<8x128xf32>
    %cst_32 = arith.constant dense<0.000000e+00> : vector<8x128xf32>
    %129 = tpu.matmul %125, %3, %cst_32 {dimension_numbers = #tpu.dot_dimension_numbers<[1], [0], [0], [1], [0, 0, 1, 1], [], []>} : vector<8x32xf32>, vector<32x128xf32>, vector<8x128xf32> -> vector<8x128xf32>
    %130 = arith.addf %128, %129 : vector<8x128xf32>
    %131 = vector.extract_strided_slice %130 {offsets = [0, 0], sizes = [8, 32], strides = [1, 1]} : vector<8x128xf32> to vector<8x32xf32>
    %132 = arith.negf %131 : vector<8x32xf32>
    %133 = math.exp %132 : vector<8x32xf32>
    %cst_33 = arith.constant 1.000000e+00 : f32
    %134 = vector.broadcast %cst_33 : f32 to vector<8x32xf32>
    %135 = arith.addf %134, %133 : vector<8x32xf32>
    %136 = arith.divf %134, %135 : vector<8x32xf32>
    %137 = vector.extract_strided_slice %130 {offsets = [0, 32], sizes = [8, 32], strides = [1, 1]} : vector<8x128xf32> to vector<8x32xf32>
    %138 = arith.negf %137 : vector<8x32xf32>
    %139 = math.exp %138 : vector<8x32xf32>
    %cst_34 = arith.constant 1.000000e+00 : f32
    %140 = vector.broadcast %cst_34 : f32 to vector<8x32xf32>
    %141 = arith.addf %140, %139 : vector<8x32xf32>
    %142 = arith.divf %140, %141 : vector<8x32xf32>
    %143 = vector.extract_strided_slice %130 {offsets = [0, 64], sizes = [8, 32], strides = [1, 1]} : vector<8x128xf32> to vector<8x32xf32>
    %144 = math.tanh %143 : vector<8x32xf32>
    %145 = vector.extract_strided_slice %130 {offsets = [0, 96], sizes = [8, 32], strides = [1, 1]} : vector<8x128xf32> to vector<8x32xf32>
    %146 = arith.negf %145 : vector<8x32xf32>
    %147 = math.exp %146 : vector<8x32xf32>
    %cst_35 = arith.constant 1.000000e+00 : f32
    %148 = vector.broadcast %cst_35 : f32 to vector<8x32xf32>
    %149 = arith.addf %148, %147 : vector<8x32xf32>
    %150 = arith.divf %148, %149 : vector<8x32xf32>
    %151 = arith.mulf %142, %123 : vector<8x32xf32>
    %152 = arith.mulf %136, %144 : vector<8x32xf32>
    %153 = arith.addf %151, %152 : vector<8x32xf32>
    %154 = math.tanh %153 : vector<8x32xf32>
    %155 = arith.mulf %150, %154 : vector<8x32xf32>
    %c5_i32 = arith.constant 5 : i32
    %156 = arith.index_cast %c5_i32 : i32 to index
    %c0_36 = arith.constant 0 : index
    %c0_37 = arith.constant 0 : index
    %157 = vector.load %arg2[%156, %c0_36, %c0_37] : memref<8x8x128xf32, #tpu.memory_space<vmem>>, vector<1x8x128xf32>
    %158 = vector.shape_cast %157 : vector<1x8x128xf32> to vector<8x128xf32>
    %cst_38 = arith.constant dense<0.000000e+00> : vector<8x128xf32>
    %159 = tpu.matmul %155, %3, %cst_38 {dimension_numbers = #tpu.dot_dimension_numbers<[1], [0], [0], [1], [0, 0, 1, 1], [], []>} : vector<8x32xf32>, vector<32x128xf32>, vector<8x128xf32> -> vector<8x128xf32>
    %160 = arith.addf %158, %159 : vector<8x128xf32>
    %161 = vector.extract_strided_slice %160 {offsets = [0, 0], sizes = [8, 32], strides = [1, 1]} : vector<8x128xf32> to vector<8x32xf32>
    %162 = arith.negf %161 : vector<8x32xf32>
    %163 = math.exp %162 : vector<8x32xf32>
    %cst_39 = arith.constant 1.000000e+00 : f32
    %164 = vector.broadcast %cst_39 : f32 to vector<8x32xf32>
    %165 = arith.addf %164, %163 : vector<8x32xf32>
    %166 = arith.divf %164, %165 : vector<8x32xf32>
    %167 = vector.extract_strided_slice %160 {offsets = [0, 32], sizes = [8, 32], strides = [1, 1]} : vector<8x128xf32> to vector<8x32xf32>
    %168 = arith.negf %167 : vector<8x32xf32>
    %169 = math.exp %168 : vector<8x32xf32>
    %cst_40 = arith.constant 1.000000e+00 : f32
    %170 = vector.broadcast %cst_40 : f32 to vector<8x32xf32>
    %171 = arith.addf %170, %169 : vector<8x32xf32>
    %172 = arith.divf %170, %171 : vector<8x32xf32>
    %173 = vector.extract_strided_slice %160 {offsets = [0, 64], sizes = [8, 32], strides = [1, 1]} : vector<8x128xf32> to vector<8x32xf32>
    %174 = math.tanh %173 : vector<8x32xf32>
    %175 = vector.extract_strided_slice %160 {offsets = [0, 96], sizes = [8, 32], strides = [1, 1]} : vector<8x128xf32> to vector<8x32xf32>
    %176 = arith.negf %175 : vector<8x32xf32>
    %177 = math.exp %176 : vector<8x32xf32>
    %cst_41 = arith.constant 1.000000e+00 : f32
    %178 = vector.broadcast %cst_41 : f32 to vector<8x32xf32>
    %179 = arith.addf %178, %177 : vector<8x32xf32>
    %180 = arith.divf %178, %179 : vector<8x32xf32>
    %181 = arith.mulf %172, %153 : vector<8x32xf32>
    %182 = arith.mulf %166, %174 : vector<8x32xf32>
    %183 = arith.addf %181, %182 : vector<8x32xf32>
    %184 = math.tanh %183 : vector<8x32xf32>
    %185 = arith.mulf %180, %184 : vector<8x32xf32>
    %c6_i32 = arith.constant 6 : i32
    %186 = arith.index_cast %c6_i32 : i32 to index
    %c0_42 = arith.constant 0 : index
    %c0_43 = arith.constant 0 : index
    %187 = vector.load %arg2[%186, %c0_42, %c0_43] : memref<8x8x128xf32, #tpu.memory_space<vmem>>, vector<1x8x128xf32>
    %188 = vector.shape_cast %187 : vector<1x8x128xf32> to vector<8x128xf32>
    %cst_44 = arith.constant dense<0.000000e+00> : vector<8x128xf32>
    %189 = tpu.matmul %185, %3, %cst_44 {dimension_numbers = #tpu.dot_dimension_numbers<[1], [0], [0], [1], [0, 0, 1, 1], [], []>} : vector<8x32xf32>, vector<32x128xf32>, vector<8x128xf32> -> vector<8x128xf32>
    %190 = arith.addf %188, %189 : vector<8x128xf32>
    %191 = vector.extract_strided_slice %190 {offsets = [0, 0], sizes = [8, 32], strides = [1, 1]} : vector<8x128xf32> to vector<8x32xf32>
    %192 = arith.negf %191 : vector<8x32xf32>
    %193 = math.exp %192 : vector<8x32xf32>
    %cst_45 = arith.constant 1.000000e+00 : f32
    %194 = vector.broadcast %cst_45 : f32 to vector<8x32xf32>
    %195 = arith.addf %194, %193 : vector<8x32xf32>
    %196 = arith.divf %194, %195 : vector<8x32xf32>
    %197 = vector.extract_strided_slice %190 {offsets = [0, 32], sizes = [8, 32], strides = [1, 1]} : vector<8x128xf32> to vector<8x32xf32>
    %198 = arith.negf %197 : vector<8x32xf32>
    %199 = math.exp %198 : vector<8x32xf32>
    %cst_46 = arith.constant 1.000000e+00 : f32
    %200 = vector.broadcast %cst_46 : f32 to vector<8x32xf32>
    %201 = arith.addf %200, %199 : vector<8x32xf32>
    %202 = arith.divf %200, %201 : vector<8x32xf32>
    %203 = vector.extract_strided_slice %190 {offsets = [0, 64], sizes = [8, 32], strides = [1, 1]} : vector<8x128xf32> to vector<8x32xf32>
    %204 = math.tanh %203 : vector<8x32xf32>
    %205 = vector.extract_strided_slice %190 {offsets = [0, 96], sizes = [8, 32], strides = [1, 1]} : vector<8x128xf32> to vector<8x32xf32>
    %206 = arith.negf %205 : vector<8x32xf32>
    %207 = math.exp %206 : vector<8x32xf32>
    %cst_47 = arith.constant 1.000000e+00 : f32
    %208 = vector.broadcast %cst_47 : f32 to vector<8x32xf32>
    %209 = arith.addf %208, %207 : vector<8x32xf32>
    %210 = arith.divf %208, %209 : vector<8x32xf32>
    %211 = arith.mulf %202, %183 : vector<8x32xf32>
    %212 = arith.mulf %196, %204 : vector<8x32xf32>
    %213 = arith.addf %211, %212 : vector<8x32xf32>
    %214 = math.tanh %213 : vector<8x32xf32>
    %215 = arith.mulf %210, %214 : vector<8x32xf32>
    %c7_i32 = arith.constant 7 : i32
    %216 = arith.index_cast %c7_i32 : i32 to index
    %c0_48 = arith.constant 0 : index
    %c0_49 = arith.constant 0 : index
    %217 = vector.load %arg2[%216, %c0_48, %c0_49] : memref<8x8x128xf32, #tpu.memory_space<vmem>>, vector<1x8x128xf32>
    %218 = vector.shape_cast %217 : vector<1x8x128xf32> to vector<8x128xf32>
    %cst_50 = arith.constant dense<0.000000e+00> : vector<8x128xf32>
    %219 = tpu.matmul %215, %3, %cst_50 {dimension_numbers = #tpu.dot_dimension_numbers<[1], [0], [0], [1], [0, 0, 1, 1], [], []>} : vector<8x32xf32>, vector<32x128xf32>, vector<8x128xf32> -> vector<8x128xf32>
    %220 = arith.addf %218, %219 : vector<8x128xf32>
    %221 = vector.extract_strided_slice %220 {offsets = [0, 0], sizes = [8, 32], strides = [1, 1]} : vector<8x128xf32> to vector<8x32xf32>
    %222 = arith.negf %221 : vector<8x32xf32>
    %223 = math.exp %222 : vector<8x32xf32>
    %cst_51 = arith.constant 1.000000e+00 : f32
    %224 = vector.broadcast %cst_51 : f32 to vector<8x32xf32>
    %225 = arith.addf %224, %223 : vector<8x32xf32>
    %226 = arith.divf %224, %225 : vector<8x32xf32>
    %227 = vector.extract_strided_slice %220 {offsets = [0, 32], sizes = [8, 32], strides = [1, 1]} : vector<8x128xf32> to vector<8x32xf32>
    %228 = arith.negf %227 : vector<8x32xf32>
    %229 = math.exp %228 : vector<8x32xf32>
    %cst_52 = arith.constant 1.000000e+00 : f32
    %230 = vector.broadcast %cst_52 : f32 to vector<8x32xf32>
    %231 = arith.addf %230, %229 : vector<8x32xf32>
    %232 = arith.divf %230, %231 : vector<8x32xf32>
    %233 = vector.extract_strided_slice %220 {offsets = [0, 64], sizes = [8, 32], strides = [1, 1]} : vector<8x128xf32> to vector<8x32xf32>
    %234 = math.tanh %233 : vector<8x32xf32>
    %235 = vector.extract_strided_slice %220 {offsets = [0, 96], sizes = [8, 32], strides = [1, 1]} : vector<8x128xf32> to vector<8x32xf32>
    %236 = arith.negf %235 : vector<8x32xf32>
    %237 = math.exp %236 : vector<8x32xf32>
    %cst_53 = arith.constant 1.000000e+00 : f32
    %238 = vector.broadcast %cst_53 : f32 to vector<8x32xf32>
    %239 = arith.addf %238, %237 : vector<8x32xf32>
    %240 = arith.divf %238, %239 : vector<8x32xf32>
    %241 = arith.mulf %232, %213 : vector<8x32xf32>
    %242 = arith.mulf %226, %234 : vector<8x32xf32>
    %243 = arith.addf %241, %242 : vector<8x32xf32>
    %244 = math.tanh %243 : vector<8x32xf32>
    %245 = arith.mulf %240, %244 : vector<8x32xf32>
    %c8_i32 = arith.constant 8 : i32
    %c0_54 = arith.constant 0 : index
    %c0_55 = arith.constant 0 : index
    %246 = vector.load %arg7[%c0_54, %c0_55] : memref<8x32xf32, #tpu.memory_space<vmem>>, vector<8x32xf32>
    tpu.vector_store %arg7[%c0_54, %c0_55], %245 {strides = array<i32>} : memref<8x32xf32, #tpu.memory_space<vmem>>, vector<8x32xf32>,
    %c0_56 = arith.constant 0 : index
    %c0_57 = arith.constant 0 : index
    %247 = vector.load %arg8[%c0_56, %c0_57] : memref<8x32xf32, #tpu.memory_space<vmem>>, vector<8x32xf32>
    tpu.vector_store %arg8[%c0_56, %c0_57], %243 {strides = array<i32>} : memref<8x32xf32, #tpu.memory_space<vmem>>, vector<8x32xf32>,
    %c0_i32_58 = arith.constant 0 : i32
    %248 = arith.cmpi eq, %arg1, %c0_i32_58 : i32
    %249 = arith.extui %248 : i1 to i32
    %c0_i32_59 = arith.constant 0 : i32
    %250 = arith.cmpi ne, %249, %c0_i32_59 : i32
    scf.if %250 {
      %c0_60 = arith.constant 0 : index
      %c0_61 = arith.constant 0 : index
      %251 = vector.load %arg4[%c0_60, %c0_61] : memref<1x32xf32, #tpu.memory_space<vmem>>, vector<1x32xf32>
      %252 = tpu.transpose %245, [1, 0] : vector<8x32xf32> -> vector<32x8xf32>
      %cst_62 = arith.constant dense<0.000000e+00> : vector<1x8xf32>
      %253 = tpu.matmul %251, %252, %cst_62 {dimension_numbers = #tpu.dot_dimension_numbers<[1], [0], [0], [1], [0, 0, 1, 1], [], []>} : vector<1x32xf32>, vector<32x8xf32>, vector<1x8xf32> -> vector<1x8xf32>
      %c0_63 = arith.constant 0 : index
      %c0_64 = arith.constant 0 : index
      %254 = vector.load %arg5[%c0_63, %c0_64] : memref<1x1xf32, #tpu.memory_space<vmem>>, vector<1x1xf32>
      %255 = vector.broadcast %254 : vector<1x1xf32> to vector<1x8xf32>
      %256 = arith.addf %253, %255 : vector<1x8xf32>
      %c0_65 = arith.constant 0 : index
      %c0_66 = arith.constant 0 : index
      %257 = vector.load %arg6[%c0_65, %c0_66] : memref<1x8xf32, #tpu.memory_space<vmem>>, vector<1x8xf32>
      tpu.vector_store %arg6[%c0_65, %c0_66], %256 {strides = array<i32>} : memref<1x8xf32, #tpu.memory_space<vmem>>, vector<1x8xf32>,
    } else {
    }
    return
  }
  func.func @transform_0(%arg0: i32, %arg1: i32) -> (i32, i32, i32) {
    %c0_i32 = arith.constant 0 : i32
    %c0_i32_0 = arith.constant 0 : i32
    return %arg1, %arg0, %c0_i32 : i32, i32, i32
  }
  func.func @transform_1(%arg0: i32, %arg1: i32) -> (i32, i32) {
    %c0_i32 = arith.constant 0 : i32
    %c0_i32_0 = arith.constant 0 : i32
    %c0_i32_1 = arith.constant 0 : i32
    return %c0_i32, %c0_i32_0 : i32, i32
  }
  func.func @transform_2(%arg0: i32, %arg1: i32) -> (i32, i32) {
    %c0_i32 = arith.constant 0 : i32
    %c0_i32_0 = arith.constant 0 : i32
    %c0_i32_1 = arith.constant 0 : i32
    return %c0_i32, %c0_i32_0 : i32, i32
  }
  func.func @transform_3(%arg0: i32, %arg1: i32) -> (i32, i32) {
    %c0_i32 = arith.constant 0 : i32
    %c0_i32_0 = arith.constant 0 : i32
    %c0_i32_1 = arith.constant 0 : i32
    return %c0_i32, %c0_i32_0 : i32, i32
  }
  func.func @transform_4(%arg0: i32, %arg1: i32) -> (i32, i32) {
    %c0_i32 = arith.constant 0 : i32
    %c0_i32_0 = arith.constant 0 : i32
    return %c0_i32, %arg0 : i32, i32
  }
}

</mosaic_0001>

<llo_original>
// kernel: tpu_custom_call.1
$region0: #{tpu_custom_call.1}
  #allocation0 [shape = 'u32[]', space=smem, size = 0x4, offset = 0x4, fixed_abs, tag = 'smem constant byte address 0x4 - core index']
  #allocation1 [shape = 'u32[144,128]{1,0:T(1,128)}', space=vmem, size = 0x12000, scoped, tag = 'internal scratch']
  #allocation2 [shape = 'f32[8,32]{1,0:T(8,128)}', space=vmem, size = 0x1000, scoped, tag = 'scratch operand']
  #allocation3 [shape = 'f32[8,32]{1,0:T(8,128)}', space=vmem, size = 0x1000, scoped, tag = 'scratch operand']
  #allocation4 [shape = 'f32[1,1]{1,0:T(1,128)S(1)}', space=vmem, size = 0x200, scoped, tag = 'scoped memory for tpu_custom_call.1']
  %s0 = inlined_call_operand.hbm [shape: f32[8,8,128], index: 0, kind: input, shape index: {}]
  %s1 = inlined_call_operand.hbm [shape: f32[32,128], index: 1, kind: input, shape index: {}]
  %s2 = inlined_call_operand.vmem [shape: f32[1,32], index: 2, kind: input, shape index: {}]
  %s3 = inlined_call_operand.<no memory space> [shape: f32[1,1], index: 3, kind: input, shape index: {}]
  %s4 = inlined_call_operand.hbm [shape: f32[1,8], index: 4, kind: output, shape index: {}]
  %s5 = sld [smem:[#allocation0]]
  $region42: #{tpu_custom_call.1} parent=0
    _
  %s7 = ssub.s32 1, %s5
  %s8 = scalar_select 0, %s7, %s5
  %v9 = vstv %s3
  %10 = vst [vmem:[#allocation4] sm:$0x1] %v9
  $region1: #{tpu_custom_call.1} parent=0
    #allocation5 [shape = 'u8[32768]{0}', space=vmem, size = 0x8000, scoped, tag = 'input window, operand 0, single buffered']
    #allocation6 [shape = 's32[1]{0}', space=sflag, size = 0x4, scoped, tag = 'scoped memory for tpu_custom_call.1']
    #allocation7 [shape = 's32[1]{0}', space=sflag, size = 0x4, scoped, tag = 'scoped memory for tpu_custom_call.1']
    #allocation8 [shape = 'u8[16384]{0}', space=vmem, size = 0x4000, scoped, tag = 'input window, operand 1, single buffered']
    #allocation9 [shape = 's32[1]{0}', space=sflag, size = 0x4, scoped, tag = 'scoped memory for tpu_custom_call.1']
    #allocation10 [shape = 'u8[512]{0}', space=vmem, size = 0x400, scoped, tag = 'output window, operand 0, single buffered']
    %11 = vsyncpa [#allocation6], 0
    %12 = vsyncpa [#allocation9], 0
    %13 = vsyncpa [#allocation7], 0
    // Predicated region
    $region2: #{tpu_custom_call.1} parent=1 // pred_check
      _
    $region3: #{tpu_custom_call.1} parent=1 // pred_check_branch
      %15 = sbr.rel (0) target = $region5
    $region4: #{tpu_custom_call.1} parent=1 // pred_region
      %s17 = ssub.s32 1024, 1024
      %18 = vsyncadd [#allocation6], %s17
      %s19 = sshll.u32 [#allocation5], 4
      %s20 = int_to_ptr.vmem [resolvable:$true] %s19
      %25 = dma.hbm_to_vmem [thread:$0]  %s0, 1024, %s20, [#allocation6], 128, 128, 8
    $region5: #{tpu_custom_call.1} parent=1 // pred_fallthru
      _
    // Predicated region
    $region6: #{tpu_custom_call.1} parent=1 // pred_check
      _
    $region7: #{tpu_custom_call.1} parent=1 // pred_check_branch
      %27 = sbr.rel (0) target = $region9
    $region8: #{tpu_custom_call.1} parent=1 // pred_region
      %s29 = ssub.s32 512, 512
      %30 = vsyncadd [#allocation9], %s29
      %s31 = sshll.u32 [#allocation8], 4
      %s32 = int_to_ptr.vmem [resolvable:$true] %s31
      %37 = dma.hbm_to_vmem [thread:$0]  %s1, 512, %s32, [#allocation9], 128, 128, 8
    $region9: #{tpu_custom_call.1} parent=1 // pred_fallthru
      _
    // Predicated region
    $region10: #{tpu_custom_call.1} parent=1 // pred_check
      _
    $region11: #{tpu_custom_call.1} parent=1 // pred_check_branch
      %39 = sbr.rel (0) target = $region13
    $region12: #{tpu_custom_call.1} parent=1 // pred_region
      _
    $region13: #{tpu_custom_call.1} parent=1 // pred_fallthru
      _
    // Predicated region
    $region14: #{tpu_custom_call.1} parent=1 // pred_check
      _
    $region15: #{tpu_custom_call.1} parent=1 // pred_check_branch
      %41 = sbr.rel (0) target = $region17
    $region16: #{tpu_custom_call.1} parent=1 // pred_region
      _
    $region17: #{tpu_custom_call.1} parent=1 // pred_fallthru
      _
    // Predicated region
    $region18: #{tpu_custom_call.1} parent=1 // pred_check
      _
    $region19: #{tpu_custom_call.1} parent=1 // pred_check_branch
      %43 = sbr.rel (0) target = $region21
    $region20: #{tpu_custom_call.1} parent=1 // pred_region
      %44 = dma.done [#allocation6], 1024
    $region21: #{tpu_custom_call.1} parent=1 // pred_fallthru
      _
    // Predicated region
    $region22: #{tpu_custom_call.1} parent=1 // pred_check
      _
    $region23: #{tpu_custom_call.1} parent=1 // pred_check_branch
      %46 = sbr.rel (0) target = $region25
    $region24: #{tpu_custom_call.1} parent=1 // pred_region
      %47 = dma.done [#allocation9], 512
    $region25: #{tpu_custom_call.1} parent=1 // pred_fallthru
      _
    %p48 = scmp.eq.s32.totalorder 0, 0
    // Predicated region
    $region26: #{tpu_custom_call.1} parent=1 // pred_check
      %p49 = pneg %p48
    $region27: #{tpu_custom_call.1} parent=1 // pred_check_branch
      %51 = sbr.rel (%p49) target = $region29
    $region28: #{tpu_custom_call.1} parent=1 // pred_region
      %vm52 = vcmask 261120
      %53 = vst.msk [vmem:[#allocation2] sm:$0xff] %vm52, 0.0
      %54 = vst.msk [vmem:[#allocation3] sm:$0xff] %vm52, 0.0
    $region29: #{tpu_custom_call.1} parent=1 // pred_fallthru
      _
    %v55 = vld [vmem:[#allocation8] sm:$0xff]
    %v56 = vld [vmem:[#allocation8 + $0x8] sm:$0xff]
    %v57 = vld [vmem:[#allocation8 + $0x10] sm:$0xff]
    %v58 = vld [vmem:[#allocation8 + $0x18] sm:$0xff]
    %v59 = vld [vmem:[#allocation2] sm:$0xff]
    %v60 = vld [vmem:[#allocation3] sm:$0xff]
    %v61 = vld [vmem:[#allocation5] sm:$0xff]
    %vm62 = vcmask 261120
    %v64 = vsel %vm62, %v59, 0
    %66 = vmatprep.subr.mxu0 0.0
    %67 = vmatpush1.msra.mxu0 %v55
    %68 = vmatprep.subr.mxu0 0.0
    %69 = vmatpush1.msra.mxu0 %v56
    %70 = vmatprep.subr.mxu0 0.0
    %71 = vmatpush1.msra.mxu0 %v57
    %72 = vmatprep.subr.mxu0 0.0
    %73 = vmatpush1.msra.mxu0 %v58
    %74 = vmatprep.subr.mxu0 0.0
    %75 = vmatpush1.msra.mxu0 0.0
    %76 = vmatprep.subr.mxu0 0.0
    %77 = vmatpush1.msra.mxu0 0.0
    %78 = vmatprep.subr.mxu0 0.0
    %79 = vmatpush1.msra.mxu0 0.0
    %80 = vmatprep.subr.mxu0 0.0
    %81 = vmatpush1.msra.mxu0 0.0
    %82 = vmatprep.subr.mxu0 0.0
    %83 = vmatpush1.msra.mxu0 0.0
    %84 = vmatprep.subr.mxu0 0.0
    %85 = vmatpush1.msra.mxu0 0.0
    %86 = vmatprep.subr.mxu0 0.0
    %87 = vmatpush1.msra.mxu0 0.0
    %88 = vmatprep.subr.mxu0 0.0
    %89 = vmatpush1.msra.mxu0 0.0
    %90 = vmatprep.subr.mxu0 0.0
    %91 = vmatpush1.msra.mxu0 0.0
    %92 = vmatprep.subr.mxu0 0.0
    %93 = vmatpush1.msra.mxu0 0.0
    %94 = vmatprep.subr.mxu0 0.0
    %95 = vmatpush1.msra.mxu0 0.0
    %96 = vmatprep.subr.mxu0 0.0
    %97 = vmatpush1.msra.mxu0 0.0
    %98 = vmatprep.subr.mxu0 0.0
    %99 = vmatpush1.msra.mxu0 0.0
    %100 = vmatprep.subr.mxu0 0.0
    %101 = vmatpush1.msra.mxu0 0.0
    %102 = vmatprep.subr.mxu0 0.0
    %103 = vmatpush1.msra.mxu0 0.0
    %104 = vmatprep.subr.mxu0 0.0
    %105 = vmatpush1.msra.mxu0 0.0
    %106 = vmatprep.subr.mxu0 0.0
    %107 = vmatpush1.msra.mxu0 0.0
    %108 = vmatprep.subr.mxu0 0.0
    %109 = vmatpush1.msra.mxu0 0.0
    %110 = vmatprep.subr.mxu0 0.0
    %111 = vmatpush1.msra.mxu0 0.0
    %112 = vmatprep.subr.mxu0 0.0
    %113 = vmatpush1.msra.mxu0 0.0
    %114 = vmatprep.subr.mxu0 0.0
    %115 = vmatpush1.msra.mxu0 0.0
    %116 = vmatprep.subr.mxu0 0.0
    %117 = vmatpush1.msra.mxu0 0.0
    %118 = vmatprep.subr.mxu0 0.0
    %119 = vmatpush1.msra.mxu0 0.0
    %120 = vmatprep.subr.mxu0 0.0
    %121 = vmatpush1.msra.mxu0 0.0
    %122 = vmatprep.subr.mxu0 0.0
    %123 = vmatpush1.msra.mxu0 0.0
    %124 = vmatprep.subr.mxu0 0.0
    %125 = vmatpush1.msra.mxu0 0.0
    %126 = vmatprep.subr.mxu0 0.0
    %127 = vmatpush1.msra.mxu0 0.0
    %128 = vmatprep.subr.mxu0 0.0
    %129 = vmatpush1.msra.mxu0 0.0
    %130 = vmatprep.mubr.f32.mxu0 0.0
    %131 = vmatmul.mubr.f32.gmra.mrb[0].mxu0 %v64
    %v132 = vpop.f32.mrb[0].mxu0
    %v133 = vadd.f32 0.0, %v132
    %v134 = vpop.f32.mrb[0].mxu0
    %135 = vdwg.mxu0
    %v136 = vadd.f32 %v61, %v133
    %v137 = vxor.u32 %v136, 2147483648
    %v138 = vmul.f32 %v137, 1.442695
    %v139 = vpow.pop %v138
    %v140 = vadd.f32 %v139, 1.0
    %v141 = vrcp.pop %v140
    %v142 = vmul.f32 1.0, %v141
    %v143 = vtanh.pop %v136
    %145 = vrot.lane.b32.xlu0 %v60, 32
    %v146 = vpop.permute.xlu0 %145
    %v148 = vmul.f32 %v142, %v146
    %150 = vrot.lane.b32.xlu0 %v143, 64
    %v151 = vpop.permute.xlu0 %150
    %v153 = vmul.f32 %v142, %v151
    %155 = vrot.lane.b32.xlu0 %v153, 32
    %v156 = vpop.permute.xlu0 %155
    %v158 = vadd.f32 %v148, %v156
    %v159 = vtanh.pop %v158
    %161 = vrot.lane.b32.xlu0 %v159, 64
    %v162 = vpop.permute.xlu0 %161
    %v164 = vmul.f32 %v142, %v162
    %s165 = scalar_lea.vmem [#allocation5], 8
    %v166 = vld [vmem:[%s165] sm:$0xff]
    %168 = vrot.lane.b32.xlu0 %v164, 32
    %v169 = vpop.permute.xlu0 %168
    %v170 = vsel %vm62, %v169, 0
    %172 = vmatprep.subr.mxu0 0.0
    %173 = vmatpush1.msra.mxu0 %v55
    %174 = vmatprep.subr.mxu0 0.0
    %175 = vmatpush1.msra.mxu0 %v56
    %176 = vmatprep.subr.mxu0 0.0
    %177 = vmatpush1.msra.mxu0 %v57
    %178 = vmatprep.subr.mxu0 0.0
    %179 = vmatpush1.msra.mxu0 %v58
    %180 = vmatprep.subr.mxu0 0.0
    %181 = vmatpush1.msra.mxu0 0.0
    %182 = vmatprep.subr.mxu0 0.0
    %183 = vmatpush1.msra.mxu0 0.0
    %184 = vmatprep.subr.mxu0 0.0
    %185 = vmatpush1.msra.mxu0 0.0
    %186 = vmatprep.subr.mxu0 0.0
    %187 = vmatpush1.msra.mxu0 0.0
    %188 = vmatprep.subr.mxu0 0.0
    %189 = vmatpush1.msra.mxu0 0.0
    %190 = vmatprep.subr.mxu0 0.0
    %191 = vmatpush1.msra.mxu0 0.0
    %192 = vmatprep.subr.mxu0 0.0
    %193 = vmatpush1.msra.mxu0 0.0
    %194 = vmatprep.subr.mxu0 0.0
    %195 = vmatpush1.msra.mxu0 0.0
    %196 = vmatprep.subr.mxu0 0.0
    %197 = vmatpush1.msra.mxu0 0.0
    %198 = vmatprep.subr.mxu0 0.0
    %199 = vmatpush1.msra.mxu0 0.0
    %200 = vmatprep.subr.mxu0 0.0
    %201 = vmatpush1.msra.mxu0 0.0
    %202 = vmatprep.subr.mxu0 0.0
    %203 = vmatpush1.msra.mxu0 0.0
    %204 = vmatprep.subr.mxu0 0.0
    %205 = vmatpush1.msra.mxu0 0.0
    %206 = vmatprep.subr.mxu0 0.0
    %207 = vmatpush1.msra.mxu0 0.0
    %208 = vmatprep.subr.mxu0 0.0
    %209 = vmatpush1.msra.mxu0 0.0
    %210 = vmatprep.subr.mxu0 0.0
    %211 = vmatpush1.msra.mxu0 0.0
    %212 = vmatprep.subr.mxu0 0.0
    %213 = vmatpush1.msra.mxu0 0.0
    %214 = vmatprep.subr.mxu0 0.0
    %215 = vmatpush1.msra.mxu0 0.0
    %216 = vmatprep.subr.mxu0 0.0
    %217 = vmatpush1.msra.mxu0 0.0
    %218 = vmatprep.subr.mxu0 0.0
    %219 = vmatpush1.msra.mxu0 0.0
    %220 = vmatprep.subr.mxu0 0.0
    %221 = vmatpush1.msra.mxu0 0.0
    %222 = vmatprep.subr.mxu0 0.0
    %223 = vmatpush1.msra.mxu0 0.0
    %224 = vmatprep.subr.mxu0 0.0
    %225 = vmatpush1.msra.mxu0 0.0
    %226 = vmatprep.subr.mxu0 0.0
    %227 = vmatpush1.msra.mxu0 0.0
    %228 = vmatprep.subr.mxu0 0.0
    %229 = vmatpush1.msra.mxu0 0.0
    %230 = vmatprep.subr.mxu0 0.0
    %231 = vmatpush1.msra.mxu0 0.0
    %232 = vmatprep.subr.mxu0 0.0
    %233 = vmatpush1.msra.mxu0 0.0
    %234 = vmatprep.subr.mxu0 0.0
    %235 = vmatpush1.msra.mxu0 0.0
    %236 = vmatprep.mubr.f32.mxu0 0.0
    %237 = vmatmul.mubr.f32.gmra.mrb[0].mxu0 %v170
    %v238 = vpop.f32.mrb[0].mxu0
    %v239 = vadd.f32 0.0, %v238
    %v240 = vpop.f32.mrb[0].mxu0
    %241 = vdwg.mxu0
    %v242 = vadd.f32 %v166, %v239
    %v243 = vxor.u32 %v242, 2147483648
    %v244 = vmul.f32 %v243, 1.442695
    %v245 = vpow.pop %v244
    %v246 = vadd.f32 %v245, 1.0
    %v247 = vrcp.pop %v246
    %v248 = vmul.f32 1.0, %v247
    %v249 = vtanh.pop %v242
    %v250 = vmul.f32 %v248, %v158
    %252 = vrot.lane.b32.xlu0 %v249, 64
    %v253 = vpop.permute.xlu0 %252
    %v255 = vmul.f32 %v248, %v253
    %257 = vrot.lane.b32.xlu0 %v255, 32
    %v258 = vpop.permute.xlu0 %257
    %v260 = vadd.f32 %v250, %v258
    %v261 = vtanh.pop %v260
    %263 = vrot.lane.b32.xlu0 %v261, 64
    %v264 = vpop.permute.xlu0 %263
    %v266 = vmul.f32 %v248, %v264
    %s267 = scalar_lea.vmem [#allocation5], 16
    %v268 = vld [vmem:[%s267] sm:$0xff]
    %270 = vrot.lane.b32.xlu0 %v266, 32
    %v271 = vpop.permute.xlu0 %270
    %v272 = vsel %vm62, %v271, 0
    %274 = vmatprep.subr.mxu0 0.0
    %275 = vmatpush1.msra.mxu0 %v55
    %276 = vmatprep.subr.mxu0 0.0
    %277 = vmatpush1.msra.mxu0 %v56
    %278 = vmatprep.subr.mxu0 0.0
    %279 = vmatpush1.msra.mxu0 %v57
    %280 = vmatprep.subr.mxu0 0.0
    %281 = vmatpush1.msra.mxu0 %v58
    %282 = vmatprep.subr.mxu0 0.0
    %283 = vmatpush1.msra.mxu0 0.0
    %284 = vmatprep.subr.mxu0 0.0
    %285 = vmatpush1.msra.mxu0 0.0
    %286 = vmatprep.subr.mxu0 0.0
    %287 = vmatpush1.msra.mxu0 0.0
    %288 = vmatprep.subr.mxu0 0.0
    %289 = vmatpush1.msra.mxu0 0.0
    %290 = vmatprep.subr.mxu0 0.0
    %291 = vmatpush1.msra.mxu0 0.0
    %292 = vmatprep.subr.mxu0 0.0
    %293 = vmatpush1.msra.mxu0 0.0
    %294 = vmatprep.subr.mxu0 0.0
    %295 = vmatpush1.msra.mxu0 0.0
    %296 = vmatprep.subr.mxu0 0.0
    %297 = vmatpush1.msra.mxu0 0.0
    %298 = vmatprep.subr.mxu0 0.0
    %299 = vmatpush1.msra.mxu0 0.0
    %300 = vmatprep.subr.mxu0 0.0
    %301 = vmatpush1.msra.mxu0 0.0
    %302 = vmatprep.subr.mxu0 0.0
    %303 = vmatpush1.msra.mxu0 0.0
    %304 = vmatprep.subr.mxu0 0.0
    %305 = vmatpush1.msra.mxu0 0.0
    %306 = vmatprep.subr.mxu0 0.0
    %307 = vmatpush1.msra.mxu0 0.0
    %308 = vmatprep.subr.mxu0 0.0
    %309 = vmatpush1.msra.mxu0 0.0
    %310 = vmatprep.subr.mxu0 0.0
    %311 = vmatpush1.msra.mxu0 0.0
    %312 = vmatprep.subr.mxu0 0.0
    %313 = vmatpush1.msra.mxu0 0.0
    %314 = vmatprep.subr.mxu0 0.0
    %315 = vmatpush1.msra.mxu0 0.0
    %316 = vmatprep.subr.mxu0 0.0
    %317 = vmatpush1.msra.mxu0 0.0
    %318 = vmatprep.subr.mxu0 0.0
    %319 = vmatpush1.msra.mxu0 0.0
    %320 = vmatprep.subr.mxu0 0.0
    %321 = vmatpush1.msra.mxu0 0.0
    %322 = vmatprep.subr.mxu0 0.0
    %323 = vmatpush1.msra.mxu0 0.0
    %324 = vmatprep.subr.mxu0 0.0
    %325 = vmatpush1.msra.mxu0 0.0
    %326 = vmatprep.subr.mxu0 0.0
    %327 = vmatpush1.msra.mxu0 0.0
    %328 = vmatprep.subr.mxu0 0.0
    %329 = vmatpush1.msra.mxu0 0.0
    %330 = vmatprep.subr.mxu0 0.0
    %331 = vmatpush1.msra.mxu0 0.0
    %332 = vmatprep.subr.mxu0 0.0
    %333 = vmatpush1.msra.mxu0 0.0
    %334 = vmatprep.subr.mxu0 0.0
    %335 = vmatpush1.msra.mxu0 0.0
    %336 = vmatprep.subr.mxu0 0.0
    %337 = vmatpush1.msra.mxu0 0.0
    %338 = vmatprep.mubr.f32.mxu0 0.0
    %339 = vmatmul.mubr.f32.gmra.mrb[0].mxu0 %v272
    %v340 = vpop.f32.mrb[0].mxu0
    %v341 = vadd.f32 0.0, %v340
    %v342 = vpop.f32.mrb[0].mxu0
    %343 = vdwg.mxu0
    %v344 = vadd.f32 %v268, %v341
    %v345 = vxor.u32 %v344, 2147483648
    %v346 = vmul.f32 %v345, 1.442695
    %v347 = vpow.pop %v346
    %v348 = vadd.f32 %v347, 1.0
    %v349 = vrcp.pop %v348
    %v350 = vmul.f32 1.0, %v349
    %v351 = vtanh.pop %v344
    %v352 = vmul.f32 %v350, %v260
    %354 = vrot.lane.b32.xlu0 %v351, 64
    %v355 = vpop.permute.xlu0 %354
    %v357 = vmul.f32 %v350, %v355
    %359 = vrot.lane.b32.xlu0 %v357, 32
    %v360 = vpop.permute.xlu0 %359
    %v362 = vadd.f32 %v352, %v360
    %v363 = vtanh.pop %v362
    %365 = vrot.lane.b32.xlu0 %v363, 64
    %v366 = vpop.permute.xlu0 %365
    %v368 = vmul.f32 %v350, %v366
    %s369 = scalar_lea.vmem [#allocation5], 24
    %v370 = vld [vmem:[%s369] sm:$0xff]
    %372 = vrot.lane.b32.xlu0 %v368, 32
    %v373 = vpop.permute.xlu0 %372
    %v374 = vsel %vm62, %v373, 0
    %376 = vmatprep.subr.mxu0 0.0
    %377 = vmatpush1.msra.mxu0 %v55
    %378 = vmatprep.subr.mxu0 0.0
    %379 = vmatpush1.msra.mxu0 %v56
    %380 = vmatprep.subr.mxu0 0.0
    %381 = vmatpush1.msra.mxu0 %v57
    %382 = vmatprep.subr.mxu0 0.0
    %383 = vmatpush1.msra.mxu0 %v58
    %384 = vmatprep.subr.mxu0 0.0
    %385 = vmatpush1.msra.mxu0 0.0
    %386 = vmatprep.subr.mxu0 0.0
    %387 = vmatpush1.msra.mxu0 0.0
    %388 = vmatprep.subr.mxu0 0.0
    %389 = vmatpush1.msra.mxu0 0.0
    %390 = vmatprep.subr.mxu0 0.0
    %391 = vmatpush1.msra.mxu0 0.0
    %392 = vmatprep.subr.mxu0 0.0
    %393 = vmatpush1.msra.mxu0 0.0
    %394 = vmatprep.subr.mxu0 0.0
    %395 = vmatpush1.msra.mxu0 0.0
    %396 = vmatprep.subr.mxu0 0.0
    %397 = vmatpush1.msra.mxu0 0.0
    %398 = vmatprep.subr.mxu0 0.0
    %399 = vmatpush1.msra.mxu0 0.0
    %400 = vmatprep.subr.mxu0 0.0
    %401 = vmatpush1.msra.mxu0 0.0
    %402 = vmatprep.subr.mxu0 0.0
    %403 = vmatpush1.msra.mxu0 0.0
    %404 = vmatprep.subr.mxu0 0.0
    %405 = vmatpush1.msra.mxu0 0.0
    %406 = vmatprep.subr.mxu0 0.0
    %407 = vmatpush1.msra.mxu0 0.0
    %408 = vmatprep.subr.mxu0 0.0
    %409 = vmatpush1.msra.mxu0 0.0
    %410 = vmatprep.subr.mxu0 0.0
    %411 = vmatpush1.msra.mxu0 0.0
    %412 = vmatprep.subr.mxu0 0.0
    %413 = vmatpush1.msra.mxu0 0.0
    %414 = vmatprep.subr.mxu0 0.0
    %415 = vmatpush1.msra.mxu0 0.0
    %416 = vmatprep.subr.mxu0 0.0
    %417 = vmatpush1.msra.mxu0 0.0
    %418 = vmatprep.subr.mxu0 0.0
    %419 = vmatpush1.msra.mxu0 0.0
    %420 = vmatprep.subr.mxu0 0.0
    %421 = vmatpush1.msra.mxu0 0.0
    %422 = vmatprep.subr.mxu0 0.0
    %423 = vmatpush1.msra.mxu0 0.0
    %424 = vmatprep.subr.mxu0 0.0
    %425 = vmatpush1.msra.mxu0 0.0
    %426 = vmatprep.subr.mxu0 0.0
    %427 = vmatpush1.msra.mxu0 0.0
    %428 = vmatprep.subr.mxu0 0.0
    %429 = vmatpush1.msra.mxu0 0.0
    %430 = vmatprep.subr.mxu0 0.0
    %431 = vmatpush1.msra.mxu0 0.0
    %432 = vmatprep.subr.mxu0 0.0
    %433 = vmatpush1.msra.mxu0 0.0
    %434 = vmatprep.subr.mxu0 0.0
    %435 = vmatpush1.msra.mxu0 0.0
    %436 = vmatprep.subr.mxu0 0.0
    %437 = vmatpush1.msra.mxu0 0.0
    %438 = vmatprep.subr.mxu0 0.0
    %439 = vmatpush1.msra.mxu0 0.0
    %440 = vmatprep.mubr.f32.mxu0 0.0
    %441 = vmatmul.mubr.f32.gmra.mrb[0].mxu0 %v374
    %v442 = vpop.f32.mrb[0].mxu0
    %v443 = vadd.f32 0.0, %v442
    %v444 = vpop.f32.mrb[0].mxu0
    %445 = vdwg.mxu0
    %v446 = vadd.f32 %v370, %v443
    %v447 = vxor.u32 %v446, 2147483648
    %v448 = vmul.f32 %v447, 1.442695
    %v449 = vpow.pop %v448
    %v450 = vadd.f32 %v449, 1.0
    %v451 = vrcp.pop %v450
    %v452 = vmul.f32 1.0, %v451
    %v453 = vtanh.pop %v446
    %v454 = vmul.f32 %v452, %v362
    %456 = vrot.lane.b32.xlu0 %v453, 64
    %v457 = vpop.permute.xlu0 %456
    %v459 = vmul.f32 %v452, %v457
    %461 = vrot.lane.b32.xlu0 %v459, 32
    %v462 = vpop.permute.xlu0 %461
    %v464 = vadd.f32 %v454, %v462
    %v465 = vtanh.pop %v464
    %467 = vrot.lane.b32.xlu0 %v465, 64
    %v468 = vpop.permute.xlu0 %467
    %v470 = vmul.f32 %v452, %v468
    %s471 = scalar_lea.vmem [#allocation5], 32
    %v472 = vld [vmem:[%s471] sm:$0xff]
    %474 = vrot.lane.b32.xlu0 %v470, 32
    %v475 = vpop.permute.xlu0 %474
    %v476 = vsel %vm62, %v475, 0
    %478 = vmatprep.subr.mxu0 0.0
    %479 = vmatpush1.msra.mxu0 %v55
    %480 = vmatprep.subr.mxu0 0.0
    %481 = vmatpush1.msra.mxu0 %v56
    %482 = vmatprep.subr.mxu0 0.0
    %483 = vmatpush1.msra.mxu0 %v57
    %484 = vmatprep.subr.mxu0 0.0
    %485 = vmatpush1.msra.mxu0 %v58
    %486 = vmatprep.subr.mxu0 0.0
    %487 = vmatpush1.msra.mxu0 0.0
    %488 = vmatprep.subr.mxu0 0.0
    %489 = vmatpush1.msra.mxu0 0.0
    %490 = vmatprep.subr.mxu0 0.0
    %491 = vmatpush1.msra.mxu0 0.0
    %492 = vmatprep.subr.mxu0 0.0
    %493 = vmatpush1.msra.mxu0 0.0
    %494 = vmatprep.subr.mxu0 0.0
    %495 = vmatpush1.msra.mxu0 0.0
    %496 = vmatprep.subr.mxu0 0.0
    %497 = vmatpush1.msra.mxu0 0.0
    %498 = vmatprep.subr.mxu0 0.0
    %499 = vmatpush1.msra.mxu0 0.0
    %500 = vmatprep.subr.mxu0 0.0
    %501 = vmatpush1.msra.mxu0 0.0
    %502 = vmatprep.subr.mxu0 0.0
    %503 = vmatpush1.msra.mxu0 0.0
    %504 = vmatprep.subr.mxu0 0.0
    %505 = vmatpush1.msra.mxu0 0.0
    %506 = vmatprep.subr.mxu0 0.0
    %507 = vmatpush1.msra.mxu0 0.0
    %508 = vmatprep.subr.mxu0 0.0
    %509 = vmatpush1.msra.mxu0 0.0
    %510 = vmatprep.subr.mxu0 0.0
    %511 = vmatpush1.msra.mxu0 0.0
    %512 = vmatprep.subr.mxu0 0.0
    %513 = vmatpush1.msra.mxu0 0.0
    %514 = vmatprep.subr.mxu0 0.0
    %515 = vmatpush1.msra.mxu0 0.0
    %516 = vmatprep.subr.mxu0 0.0
    %517 = vmatpush1.msra.mxu0 0.0
    %518 = vmatprep.subr.mxu0 0.0
    %519 = vmatpush1.msra.mxu0 0.0
    %520 = vmatprep.subr.mxu0 0.0
    %521 = vmatpush1.msra.mxu0 0.0
    %522 = vmatprep.subr.mxu0 0.0
    %523 = vmatpush1.msra.mxu0 0.0
    %524 = vmatprep.subr.mxu0 0.0
    %525 = vmatpush1.msra.mxu0 0.0
    %526 = vmatprep.subr.mxu0 0.0
    %527 = vmatpush1.msra.mxu0 0.0
    %528 = vmatprep.subr.mxu0 0.0
    %529 = vmatpush1.msra.mxu0 0.0
    %530 = vmatprep.subr.mxu0 0.0
    %531 = vmatpush1.msra.mxu0 0.0
    %532 = vmatprep.subr.mxu0 0.0
    %533 = vmatpush1.msra.mxu0 0.0
    %534 = vmatprep.subr.mxu0 0.0
    %535 = vmatpush1.msra.mxu0 0.0
    %536 = vmatprep.subr.mxu0 0.0
    %537 = vmatpush1.msra.mxu0 0.0
    %538 = vmatprep.subr.mxu0 0.0
    %539 = vmatpush1.msra.mxu0 0.0
    %540 = vmatprep.subr.mxu0 0.0
    %541 = vmatpush1.msra.mxu0 0.0
    %542 = vmatprep.mubr.f32.mxu0 0.0
    %543 = vmatmul.mubr.f32.gmra.mrb[0].mxu0 %v476
    %v544 = vpop.f32.mrb[0].mxu0
    %v545 = vadd.f32 0.0, %v544
    %v546 = vpop.f32.mrb[0].mxu0
    %547 = vdwg.mxu0
    %v548 = vadd.f32 %v472, %v545
    %v549 = vxor.u32 %v548, 2147483648
    %v550 = vmul.f32 %v549, 1.442695
    %v551 = vpow.pop %v550
    %v552 = vadd.f32 %v551, 1.0
    %v553 = vrcp.pop %v552
    %v554 = vmul.f32 1.0, %v553
    %v555 = vtanh.pop %v548
    %v556 = vmul.f32 %v554, %v464
    %558 = vrot.lane.b32.xlu0 %v555, 64
    %v559 = vpop.permute.xlu0 %558
    %v561 = vmul.f32 %v554, %v559
    %563 = vrot.lane.b32.xlu0 %v561, 32
    %v564 = vpop.permute.xlu0 %563
    %v566 = vadd.f32 %v556, %v564
    %v567 = vtanh.pop %v566
    %569 = vrot.lane.b32.xlu0 %v567, 64
    %v570 = vpop.permute.xlu0 %569
    %v572 = vmul.f32 %v554, %v570
    %s573 = scalar_lea.vmem [#allocation5], 40
    %v574 = vld [vmem:[%s573] sm:$0xff]
    %576 = vrot.lane.b32.xlu0 %v572, 32
    %v577 = vpop.permute.xlu0 %576
    %v578 = vsel %vm62, %v577, 0
    %580 = vmatprep.subr.mxu0 0.0
    %581 = vmatpush1.msra.mxu0 %v55
    %582 = vmatprep.subr.mxu0 0.0
    %583 = vmatpush1.msra.mxu0 %v56
    %584 = vmatprep.subr.mxu0 0.0
    %585 = vmatpush1.msra.mxu0 %v57
    %586 = vmatprep.subr.mxu0 0.0
    %587 = vmatpush1.msra.mxu0 %v58
    %588 = vmatprep.subr.mxu0 0.0
    %589 = vmatpush1.msra.mxu0 0.0
    %590 = vmatprep.subr.mxu0 0.0
    %591 = vmatpush1.msra.mxu0 0.0
    %592 = vmatprep.subr.mxu0 0.0
    %593 = vmatpush1.msra.mxu0 0.0
    %594 = vmatprep.subr.mxu0 0.0
    %595 = vmatpush1.msra.mxu0 0.0
    %596 = vmatprep.subr.mxu0 0.0
    %597 = vmatpush1.msra.mxu0 0.0
    %598 = vmatprep.subr.mxu0 0.0
    %599 = vmatpush1.msra.mxu0 0.0
    %600 = vmatprep.subr.mxu0 0.0
    %601 = vmatpush1.msra.mxu0 0.0
    %602 = vmatprep.subr.mxu0 0.0
    %603 = vmatpush1.msra.mxu0 0.0
    %604 = vmatprep.subr.mxu0 0.0
    %605 = vmatpush1.msra.mxu0 0.0
    %606 = vmatprep.subr.mxu0 0.0
    %607 = vmatpush1.msra.mxu0 0.0
    %608 = vmatprep.subr.mxu0 0.0
    %609 = vmatpush1.msra.mxu0 0.0
    %610 = vmatprep.subr.mxu0 0.0
    %611 = vmatpush1.msra.mxu0 0.0
    %612 = vmatprep.subr.mxu0 0.0
    %613 = vmatpush1.msra.mxu0 0.0
    %614 = vmatprep.subr.mxu0 0.0
    %615 = vmatpush1.msra.mxu0 0.0
    %616 = vmatprep.subr.mxu0 0.0
    %617 = vmatpush1.msra.mxu0 0.0
    %618 = vmatprep.subr.mxu0 0.0
    %619 = vmatpush1.msra.mxu0 0.0
    %620 = vmatprep.subr.mxu0 0.0
    %621 = vmatpush1.msra.mxu0 0.0
    %622 = vmatprep.subr.mxu0 0.0
    %623 = vmatpush1.msra.mxu0 0.0
    %624 = vmatprep.subr.mxu0 0.0
    %625 = vmatpush1.msra.mxu0 0.0
    %626 = vmatprep.subr.mxu0 0.0
    %627 = vmatpush1.msra.mxu0 0.0
    %628 = vmatprep.subr.mxu0 0.0
    %629 = vmatpush1.msra.mxu0 0.0
    %630 = vmatprep.subr.mxu0 0.0
    %631 = vmatpush1.msra.mxu0 0.0
    %632 = vmatprep.subr.mxu0 0.0
    %633 = vmatpush1.msra.mxu0 0.0
    %634 = vmatprep.subr.mxu0 0.0
    %635 = vmatpush1.msra.mxu0 0.0
    %636 = vmatprep.subr.mxu0 0.0
    %637 = vmatpush1.msra.mxu0 0.0
    %638 = vmatprep.subr.mxu0 0.0
    %639 = vmatpush1.msra.mxu0 0.0
    %640 = vmatprep.subr.mxu0 0.0
    %641 = vmatpush1.msra.mxu0 0.0
    %642 = vmatprep.subr.mxu0 0.0
    %643 = vmatpush1.msra.mxu0 0.0
    %644 = vmatprep.mubr.f32.mxu0 0.0
    %645 = vmatmul.mubr.f32.gmra.mrb[0].mxu0 %v578
    %v646 = vpop.f32.mrb[0].mxu0
    %v647 = vadd.f32 0.0, %v646
    %v648 = vpop.f32.mrb[0].mxu0
    %649 = vdwg.mxu0
    %v650 = vadd.f32 %v574, %v647
    %v651 = vxor.u32 %v650, 2147483648
    %v652 = vmul.f32 %v651, 1.442695
    %v653 = vpow.pop %v652
    %v654 = vadd.f32 %v653, 1.0
    %v655 = vrcp.pop %v654
    %v656 = vmul.f32 1.0, %v655
    %v657 = vtanh.pop %v650
    %v658 = vmul.f32 %v656, %v566
    %660 = vrot.lane.b32.xlu0 %v657, 64
    %v661 = vpop.permute.xlu0 %660
    %v663 = vmul.f32 %v656, %v661
    %665 = vrot.lane.b32.xlu0 %v663, 32
    %v666 = vpop.permute.xlu0 %665
    %v668 = vadd.f32 %v658, %v666
    %v669 = vtanh.pop %v668
    %671 = vrot.lane.b32.xlu0 %v669, 64
    %v672 = vpop.permute.xlu0 %671
    %v674 = vmul.f32 %v656, %v672
    %s675 = scalar_lea.vmem [#allocation5], 48
    %v676 = vld [vmem:[%s675] sm:$0xff]
    %678 = vrot.lane.b32.xlu0 %v674, 32
    %v679 = vpop.permute.xlu0 %678
    %v680 = vsel %vm62, %v679, 0
    %682 = vmatprep.subr.mxu0 0.0
    %683 = vmatpush1.msra.mxu0 %v55
    %684 = vmatprep.subr.mxu0 0.0
    %685 = vmatpush1.msra.mxu0 %v56
    %686 = vmatprep.subr.mxu0 0.0
    %687 = vmatpush1.msra.mxu0 %v57
    %688 = vmatprep.subr.mxu0 0.0
    %689 = vmatpush1.msra.mxu0 %v58
    %690 = vmatprep.subr.mxu0 0.0
    %691 = vmatpush1.msra.mxu0 0.0
    %692 = vmatprep.subr.mxu0 0.0
    %693 = vmatpush1.msra.mxu0 0.0
    %694 = vmatprep.subr.mxu0 0.0
    %695 = vmatpush1.msra.mxu0 0.0
    %696 = vmatprep.subr.mxu0 0.0
    %697 = vmatpush1.msra.mxu0 0.0
    %698 = vmatprep.subr.mxu0 0.0
    %699 = vmatpush1.msra.mxu0 0.0
    %700 = vmatprep.subr.mxu0 0.0
    %701 = vmatpush1.msra.mxu0 0.0
    %702 = vmatprep.subr.mxu0 0.0
    %703 = vmatpush1.msra.mxu0 0.0
    %704 = vmatprep.subr.mxu0 0.0
    %705 = vmatpush1.msra.mxu0 0.0
    %706 = vmatprep.subr.mxu0 0.0
    %707 = vmatpush1.msra.mxu0 0.0
    %708 = vmatprep.subr.mxu0 0.0
    %709 = vmatpush1.msra.mxu0 0.0
    %710 = vmatprep.subr.mxu0 0.0
    %711 = vmatpush1.msra.mxu0 0.0
    %712 = vmatprep.subr.mxu0 0.0
    %713 = vmatpush1.msra.mxu0 0.0
    %714 = vmatprep.subr.mxu0 0.0
    %715 = vmatpush1.msra.mxu0 0.0
    %716 = vmatprep.subr.mxu0 0.0
    %717 = vmatpush1.msra.mxu0 0.0
    %718 = vmatprep.subr.mxu0 0.0
    %719 = vmatpush1.msra.mxu0 0.0
    %720 = vmatprep.subr.mxu0 0.0
    %721 = vmatpush1.msra.mxu0 0.0
    %722 = vmatprep.subr.mxu0 0.0
    %723 = vmatpush1.msra.mxu0 0.0
    %724 = vmatprep.subr.mxu0 0.0
    %725 = vmatpush1.msra.mxu0 0.0
    %726 = vmatprep.subr.mxu0 0.0
    %727 = vmatpush1.msra.mxu0 0.0
    %728 = vmatprep.subr.mxu0 0.0
    %729 = vmatpush1.msra.mxu0 0.0
    %730 = vmatprep.subr.mxu0 0.0
    %731 = vmatpush1.msra.mxu0 0.0
    %732 = vmatprep.subr.mxu0 0.0
    %733 = vmatpush1.msra.mxu0 0.0
    %734 = vmatprep.subr.mxu0 0.0
    %735 = vmatpush1.msra.mxu0 0.0
    %736 = vmatprep.subr.mxu0 0.0
    %737 = vmatpush1.msra.mxu0 0.0
    %738 = vmatprep.subr.mxu0 0.0
    %739 = vmatpush1.msra.mxu0 0.0
    %740 = vmatprep.subr.mxu0 0.0
    %741 = vmatpush1.msra.mxu0 0.0
    %742 = vmatprep.subr.mxu0 0.0
    %743 = vmatpush1.msra.mxu0 0.0
    %744 = vmatprep.subr.mxu0 0.0
    %745 = vmatpush1.msra.mxu0 0.0
    %746 = vmatprep.mubr.f32.mxu0 0.0
    %747 = vmatmul.mubr.f32.gmra.mrb[0].mxu0 %v680
    %v748 = vpop.f32.mrb[0].mxu0
    %v749 = vadd.f32 0.0, %v748
    %v750 = vpop.f32.mrb[0].mxu0
    %751 = vdwg.mxu0
    %v752 = vadd.f32 %v676, %v749
    %v753 = vxor.u32 %v752, 2147483648
    %v754 = vmul.f32 %v753, 1.442695
    %v755 = vpow.pop %v754
    %v756 = vadd.f32 %v755, 1.0
    %v757 = vrcp.pop %v756
    %v758 = vmul.f32 1.0, %v757
    %v759 = vtanh.pop %v752
    %v760 = vmul.f32 %v758, %v668
    %762 = vrot.lane.b32.xlu0 %v759, 64
    %v763 = vpop.permute.xlu0 %762
    %v765 = vmul.f32 %v758, %v763
    %767 = vrot.lane.b32.xlu0 %v765, 32
    %v768 = vpop.permute.xlu0 %767
    %v770 = vadd.f32 %v760, %v768
    %v771 = vtanh.pop %v770
    %773 = vrot.lane.b32.xlu0 %v771, 64
    %v774 = vpop.permute.xlu0 %773
    %v776 = vmul.f32 %v758, %v774
    %s777 = scalar_lea.vmem [#allocation5], 56
    %v778 = vld [vmem:[%s777] sm:$0xff]
    %780 = vrot.lane.b32.xlu0 %v776, 32
    %v781 = vpop.permute.xlu0 %780
    %v782 = vsel %vm62, %v781, 0
    %784 = vmatprep.subr.mxu0 0.0
    %785 = vmatpush1.msra.mxu0 %v55
    %786 = vmatprep.subr.mxu0 0.0
    %787 = vmatpush1.msra.mxu0 %v56
    %788 = vmatprep.subr.mxu0 0.0
    %789 = vmatpush1.msra.mxu0 %v57
    %790 = vmatprep.subr.mxu0 0.0
    %791 = vmatpush1.msra.mxu0 %v58
    %792 = vmatprep.subr.mxu0 0.0
    %793 = vmatpush1.msra.mxu0 0.0
    %794 = vmatprep.subr.mxu0 0.0
    %795 = vmatpush1.msra.mxu0 0.0
    %796 = vmatprep.subr.mxu0 0.0
    %797 = vmatpush1.msra.mxu0 0.0
    %798 = vmatprep.subr.mxu0 0.0
    %799 = vmatpush1.msra.mxu0 0.0
    %800 = vmatprep.subr.mxu0 0.0
    %801 = vmatpush1.msra.mxu0 0.0
    %802 = vmatprep.subr.mxu0 0.0
    %803 = vmatpush1.msra.mxu0 0.0
    %804 = vmatprep.subr.mxu0 0.0
    %805 = vmatpush1.msra.mxu0 0.0
    %806 = vmatprep.subr.mxu0 0.0
    %807 = vmatpush1.msra.mxu0 0.0
    %808 = vmatprep.subr.mxu0 0.0
    %809 = vmatpush1.msra.mxu0 0.0
    %810 = vmatprep.subr.mxu0 0.0
    %811 = vmatpush1.msra.mxu0 0.0
    %812 = vmatprep.subr.mxu0 0.0
    %813 = vmatpush1.msra.mxu0 0.0
    %814 = vmatprep.subr.mxu0 0.0
    %815 = vmatpush1.msra.mxu0 0.0
    %816 = vmatprep.subr.mxu0 0.0
    %817 = vmatpush1.msra.mxu0 0.0
    %818 = vmatprep.subr.mxu0 0.0
    %819 = vmatpush1.msra.mxu0 0.0
    %820 = vmatprep.subr.mxu0 0.0
    %821 = vmatpush1.msra.mxu0 0.0
    %822 = vmatprep.subr.mxu0 0.0
    %823 = vmatpush1.msra.mxu0 0.0
    %824 = vmatprep.subr.mxu0 0.0
    %825 = vmatpush1.msra.mxu0 0.0
    %826 = vmatprep.subr.mxu0 0.0
    %827 = vmatpush1.msra.mxu0 0.0
    %828 = vmatprep.subr.mxu0 0.0
    %829 = vmatpush1.msra.mxu0 0.0
    %830 = vmatprep.subr.mxu0 0.0
    %831 = vmatpush1.msra.mxu0 0.0
    %832 = vmatprep.subr.mxu0 0.0
    %833 = vmatpush1.msra.mxu0 0.0
    %834 = vmatprep.subr.mxu0 0.0
    %835 = vmatpush1.msra.mxu0 0.0
    %836 = vmatprep.subr.mxu0 0.0
    %837 = vmatpush1.msra.mxu0 0.0
    %838 = vmatprep.subr.mxu0 0.0
    %839 = vmatpush1.msra.mxu0 0.0
    %840 = vmatprep.subr.mxu0 0.0
    %841 = vmatpush1.msra.mxu0 0.0
    %842 = vmatprep.subr.mxu0 0.0
    %843 = vmatpush1.msra.mxu0 0.0
    %844 = vmatprep.subr.mxu0 0.0
    %845 = vmatpush1.msra.mxu0 0.0
    %846 = vmatprep.subr.mxu0 0.0
    %847 = vmatpush1.msra.mxu0 0.0
    %848 = vmatprep.mubr.f32.mxu0 0.0
    %849 = vmatmul.mubr.f32.gmra.mrb[0].mxu0 %v782
    %v850 = vpop.f32.mrb[0].mxu0
    %v851 = vadd.f32 0.0, %v850
    %v852 = vpop.f32.mrb[0].mxu0
    %853 = vdwg.mxu0
    %v854 = vadd.f32 %v778, %v851
    %v855 = vxor.u32 %v854, 2147483648
    %v856 = vmul.f32 %v855, 1.442695
    %v857 = vpow.pop %v856
    %v858 = vadd.f32 %v857, 1.0
    %v859 = vrcp.pop %v858
    %v860 = vmul.f32 1.0, %v859
    %v861 = vtanh.pop %v854
    %v862 = vmul.f32 %v860, %v770
    %864 = vrot.lane.b32.xlu0 %v861, 64
    %v865 = vpop.permute.xlu0 %864
    %v867 = vmul.f32 %v860, %v865
    %869 = vrot.lane.b32.xlu0 %v867, 32
    %v870 = vpop.permute.xlu0 %869
    %v872 = vadd.f32 %v862, %v870
    %v873 = vtanh.pop %v872
    %875 = vrot.lane.b32.xlu0 %v873, 64
    %v876 = vpop.permute.xlu0 %875
    %v878 = vmul.f32 %v860, %v876
    %880 = vrot.lane.b32.xlu0 %v878, 32
    %v881 = vpop.permute.xlu0 %880
    %883 = vst.msk [vmem:[#allocation2] sm:$0xff] %vm62, %v881
    %885 = vrot.lane.b32.xlu0 %v872, 96
    %v886 = vpop.permute.xlu0 %885
    %888 = vst.msk [vmem:[#allocation3] sm:$0xff] %vm62, %v886
    // Predicated region
    $region30: #{tpu_custom_call.1} parent=1 // pred_check
      %p889 = pneg %p48
    $region31: #{tpu_custom_call.1} parent=1 // pred_check_branch
      %891 = sbr.rel (%p889) target = $region33
    $region32: #{tpu_custom_call.1} parent=1 // pred_region
      %v892 = vld [vmem:[%s2] sm:$0x1]
      %v893 = vld [vmem:[#allocation4] sm:$0x1]
      %895 = vset.pattern.permute.xlu0 0
      %896 = vperm.xlu0 %895, %v893
      %v897 = vpop.permute.xlu0 %896
      %v899 = vlaneseq
      %v900 = vshrl.u32 %v899, 7
      %v901 = vsub.s32 0, %v900
      %v902 = vrot.slane %v897, %v901
      %v904 = vsel %vm62, %v892, 0
      %v906 = vsel %vm62, %v881, 0
      %908 = vmatprep.subr.mxu0 0.0
      %909 = vmatpush1.xpose.msra.mxu0 %v906
      %910 = vmatprep.subr.mxu0 0.0
      %911 = vmatpush1.xpose.msra.mxu0 0.0
      %912 = vmatprep.subr.mxu0 0.0
      %913 = vmatpush1.xpose.msra.mxu0 0.0
      %914 = vmatprep.subr.mxu0 0.0
      %915 = vmatpush1.xpose.msra.mxu0 0.0
      %916 = vmatprep.subr.mxu0 0.0
      %917 = vmatpush1.xpose.msra.mxu0 0.0
      %918 = vmatprep.subr.mxu0 0.0
      %919 = vmatpush1.xpose.msra.mxu0 0.0
      %920 = vmatprep.subr.mxu0 0.0
      %921 = vmatpush1.xpose.msra.mxu0 0.0
      %922 = vmatprep.subr.mxu0 0.0
      %923 = vmatpush1.xpose.msra.mxu0 0.0
      %924 = vmatprep.subr.mxu0 0.0
      %925 = vmatpush1.xpose.msra.mxu0 0.0
      %926 = vmatprep.subr.mxu0 0.0
      %927 = vmatpush1.xpose.msra.mxu0 0.0
      %928 = vmatprep.subr.mxu0 0.0
      %929 = vmatpush1.xpose.msra.mxu0 0.0
      %930 = vmatprep.subr.mxu0 0.0
      %931 = vmatpush1.xpose.msra.mxu0 0.0
      %932 = vmatprep.subr.mxu0 0.0
      %933 = vmatpush1.xpose.msra.mxu0 0.0
      %934 = vmatprep.subr.mxu0 0.0
      %935 = vmatpush1.xpose.msra.mxu0 0.0
      %936 = vmatprep.subr.mxu0 0.0
      %937 = vmatpush1.xpose.msra.mxu0 0.0
      %938 = vmatprep.subr.mxu0 0.0
      %939 = vmatpush1.xpose.msra.mxu0 0.0
      %940 = vmatprep.subr.mxu0 0.0
      %941 = vmatpush1.xpose.msra.mxu0 0.0
      %942 = vmatprep.subr.mxu0 0.0
      %943 = vmatpush1.xpose.msra.mxu0 0.0
      %944 = vmatprep.subr.mxu0 0.0
      %945 = vmatpush1.xpose.msra.mxu0 0.0
      %946 = vmatprep.subr.mxu0 0.0
      %947 = vmatpush1.xpose.msra.mxu0 0.0
      %948 = vmatprep.subr.mxu0 0.0
      %949 = vmatpush1.xpose.msra.mxu0 0.0
      %950 = vmatprep.subr.mxu0 0.0
      %951 = vmatpush1.xpose.msra.mxu0 0.0
      %952 = vmatprep.subr.mxu0 0.0
      %953 = vmatpush1.xpose.msra.mxu0 0.0
      %954 = vmatprep.subr.mxu0 0.0
      %955 = vmatpush1.xpose.msra.mxu0 0.0
      %956 = vmatprep.subr.mxu0 0.0
      %957 = vmatpush1.xpose.msra.mxu0 0.0
      %958 = vmatprep.subr.mxu0 0.0
      %959 = vmatpush1.xpose.msra.mxu0 0.0
      %960 = vmatprep.subr.mxu0 0.0
      %961 = vmatpush1.xpose.msra.mxu0 0.0
      %962 = vmatprep.subr.mxu0 0.0
      %963 = vmatpush1.xpose.msra.mxu0 0.0
      %964 = vmatprep.subr.mxu0 0.0
      %965 = vmatpush1.xpose.msra.mxu0 0.0
      %966 = vmatprep.subr.mxu0 0.0
      %967 = vmatpush1.xpose.msra.mxu0 0.0
      %968 = vmatprep.subr.mxu0 0.0
      %969 = vmatpush1.xpose.msra.mxu0 0.0
      %970 = vmatprep.subr.mxu0 0.0
      %971 = vmatpush1.xpose.msra.mxu0 0.0
      %972 = vmatprep.mubr.f32.mxu0 0.0
      %973 = vmatmul.mubr.f32.gmra.mrb[0].mxu0 %v904
      %v974 = vpop.f32.mrb[0].mxu0
      %v975 = vadd.f32 %v902, %v974
      %v976 = vpop.f32.mrb[0].mxu0
      %977 = vdwg.mxu0
      %vm978 = vcmask 57344
      %979 = vst.msk [vmem:[#allocation10] sm:$0x1] %vm978, %v975
    $region33: #{tpu_custom_call.1} parent=1 // pred_fallthru
      _
    // Predicated region
    $region34: #{tpu_custom_call.1} parent=1 // pred_check
      _
    $region35: #{tpu_custom_call.1} parent=1 // pred_check_branch
      %981 = sbr.rel (0) target = $region37
    $region36: #{tpu_custom_call.1} parent=1 // pred_region
      %s983 = ssub.s32 16, 16
      %984 = vsyncadd [#allocation7], %s983
      %s986 = sshll.u32 [#allocation10], 4
      %s987 = int_to_ptr.vmem [resolvable:$true] %s986
      %989 = dma.vmem_to_hbm [thread:$0]  %s987, 16, %s4, [#allocation7]
    $region37: #{tpu_custom_call.1} parent=1 // pred_fallthru
      _
    // Predicated region
    $region38: #{tpu_custom_call.1} parent=1 // pred_check
      _
    $region39: #{tpu_custom_call.1} parent=1 // pred_check_branch
      %991 = sbr.rel (0) target = $region41
    $region40: #{tpu_custom_call.1} parent=1 // pred_region
      %992 = dma.done [#allocation7], 16
    $region41: #{tpu_custom_call.1} parent=1 // pred_fallthru
      _
    %993 = vsyncpa [#allocation6], 1
    %994 = vsyncpa [#allocation9], 1
    %995 = vsyncpa [#allocation7], 1

</llo_original>
